<compile_context>
chip_gen: v5e
topology: v5e:2x2
jax: 0.10.0
libtpu: 0.0.40
codegen_flags: <defaults>
</compile_context>

<pallas_src>
import jax
import jax.numpy as jnp
from jax.experimental import pallas as pl
from jax.experimental.pallas import tpu as pltpu


def _sum_affine_kernel(x_ref, o_ref):
    # x_ref block: (bt, C, rt, 128)  [packed path]  or  (bt, C, ts)  [fallback]
    # o_ref block: (bt, rt, 128)                     or  (bt, ts)
    c = x_ref.shape[1]
    # f32 accumulation over the channel axis; dtype= avoids materialising a
    # full f32 copy of a (possibly bf16) block before the reduce.
    s = jnp.sum(x_ref[...], axis=1, dtype=jnp.float32)
    # (2*x + 1).sum(C) == 2 * sum(x, C) + C
    o_ref[...] = (s * 2.0 + float(c)).astype(o_ref.dtype)


def _vmem_budget():
    """Return (vmem_limit_bytes, combined in+out per-block byte budget)."""
    cap = None
    try:
        cap = int(pltpu.get_tpu_info().vmem_capacity_bytes)
    except Exception:
        cap = None
    if cap is None:
        try:
            kind = jax.devices()[0].device_kind.lower()
            cap = 128 * 1024 * 1024 if ("v5" in kind or "v6" in kind) else 64 * 1024 * 1024
        except Exception:
            cap = 64 * 1024 * 1024  # conservative default (v7x-safe)
    if cap >= 100 * 1024 * 1024:
        # v5e / v6e: 128 MiB physical VMEM -> big blocks, 64 MiB scoped limit.
        return 64 * 1024 * 1024, 24 * 1024 * 1024
    # v7x-class: 64 MiB physical VMEM -> double-buffered blocks <= ~24 MiB
    # under a 32 MiB scoped limit (never push toward the 64 MiB ceiling).
    return 32 * 1024 * 1024, 12 * 1024 * 1024


def _packed_tiles(B, C, R, itemsize, budget, sub):
    """Pick (bt, rt) for the packed (bt, C, rt, 128) / (bt, rt, 128) blocks."""
    unit = 128 * (C + 1) * itemsize          # in+out bytes per (batch, 128-lane row)
    rows = max(1, budget // unit)            # max bt*rt rows per block
    if rows >= R:
        rt = R                               # full spatial slab per batch element
        bt = max(1, min(B, rows // R))       # then tile batch to fill the budget
    else:
        bt = 1
        rt = (rows // sub) * sub             # sublane-aligned spatial tile
        if rt < sub:
            rt = min(sub, R)
        if rt > R or R < sub:
            rt = R                           # non-multiple-of-sub only allowed as full extent
    # v7x has 2 TensorCores: keep >= 2 programs on a parallel axis for
    # non-trivial problems so both cores (and HBM streams) are used.
    total_in_bytes = B * C * R * 128 * itemsize
    if (pl.cdiv(B, bt) * pl.cdiv(R, rt)) < 2 and total_in_bytes >= (1 << 20):
        if B >= 2:
            bt = pl.cdiv(B, 2)
        elif R >= 2 * sub:
            rt = ((pl.cdiv(R, 2) + sub - 1) // sub) * sub
    return int(bt), int(rt)


def _fallback_tiles(B, C, S, itemsize, budget, sub):
    """Pick (bt, ts) for the (bt, C, ts) / (bt, ts) blocks (S not 128-aligned)."""
    per_elem = (C + 1) * itemsize            # in+out bytes per (batch, spatial) element
    if B * S * per_elem <= budget:
        return B, S                          # whole problem in one block
    ts = (budget // (B * per_elem) // 128) * 128
    if ts >= 128:
        return B, int(min(ts, S))            # full batch, 128-aligned spatial tile
    bt = B if B < sub else sub               # sublane-dense (or full-extent) output rows
    ts = max(128, (budget // (bt * per_elem) // 128) * 128)
    return int(bt), int(min(ts, S))


def pt_module_forward(x):
    """x: (B, C, H, W) -> (B, H, W); out[b] = (2*x[b] + 1).sum(axis=0)."""
    B, C, H, W = x.shape
    S = H * W
    itemsize = jnp.dtype(x.dtype).itemsize
    sub = max(8, 32 // max(int(itemsize), 1))   # sublane multiple: 8 f32, 16 bf16, 32 int8

    vmem_limit, block_budget = _vmem_budget()

    cost = pl.CostEstimate(
        flops=2 * B * C * S,                     # channel-sum adds + affine
        transcendentals=0,
        bytes_accessed=B * C * S * itemsize + B * S * itemsize,
    )
    cparams = pltpu.CompilerParams(
        dimension_semantics=("parallel", "parallel"),
        vmem_limit_bytes=vmem_limit,
    )

    if S % 128 == 0:
        # Packed path: spatial axis -> (R, 128); fully dense vregs, VALU reduce.
        R = S // 128
        xp = x.reshape(B, C, R, 128)
        bt, rt = _packed_tiles(B, C, R, itemsize, block_budget, sub)
        grid = (pl.cdiv(B, bt), pl.cdiv(R, rt))
        out = pl.pallas_call(
            _sum_affine_kernel,
            out_shape=jax.ShapeDtypeStruct((B, R, 128), x.dtype),
            grid_spec=pltpu.PrefetchScalarGridSpec(
                num_scalar_prefetch=0,
                grid=grid,
                in_specs=[pl.BlockSpec((bt, C, rt, 128), lambda b, r: (b, 0, r, 0))],
                out_specs=pl.BlockSpec((bt, rt, 128), lambda b, r: (b, r, 0)),
            ),
            compiler_params=cparams,
            cost_estimate=cost,
        )(xp)
        return out.reshape(B, H, W)

    # Fallback path (S not a multiple of 128): lane axis = flattened spatial,
    # sublane axis = C; cross-sublane XLU reduce. Ragged edge blocks rely on
    # Pallas masking out-of-bounds output writes.
    xf = x.reshape(B, C, S)
    bt, ts = _fallback_tiles(B, C, S, itemsize, block_budget, sub)
    grid = (pl.cdiv(B, bt), pl.cdiv(S, ts))
    out = pl.pallas_call(
        _sum_affine_kernel,
        out_shape=jax.ShapeDtypeStruct((B, S), x.dtype),
        grid_spec=pltpu.PrefetchScalarGridSpec(
            num_scalar_prefetch=0,
            grid=grid,
            in_specs=[pl.BlockSpec((bt, C, ts), lambda b, s: (b, 0, s))],
            out_specs=pl.BlockSpec((bt, ts), lambda b, s: (b, s)),
        ),
        compiler_params=cparams,
        cost_estimate=cost,
    )(xf)
    return out.reshape(B, H, W)


if __name__ == "__main__":
    key = jax.random.PRNGKey(0)
    B, C, H, W = 2, 4, 16, 16
    x = jax.random.normal(key, (B, C, H, W), dtype=jnp.float32)

    out = pt_module_forward(x)
    out = jax.block_until_ready(out)

    # Reference check (plain JAX).
    ref = jnp.sum(x * 2.0 + 1.0, axis=1)
    assert out.shape == (B, H, W)
    assert jnp.allclose(out, ref, atol=1e-5), "mismatch vs reference"

    print("KERNEL_OK")
</pallas_src>

<mosaic_0001>
module attributes {stable_mosaic.version = 11 : i64} {
  func.func @_sum_affine_kernel(%arg0: i32, %arg1: i32, %arg2: memref<2x4x2x128xf32, #tpu.memory_space<vmem>>, %arg3: memref<2x2x128xf32, #tpu.memory_space<vmem>>) attributes {dimension_semantics = [#tpu.dimension_semantics<parallel>, #tpu.dimension_semantics<parallel>], iteration_bounds = array<i64: 1, 1>, scalar_prefetch = 0 : i64, scratch_operands = 0 : i64, tpu.core_type = #tpu.core_type<tc>, window_params = [{transform_indices = @transform_0, window_bounds = array<i64: 2, 4, 2, 128>}, {transform_indices = @transform_1, window_bounds = array<i64: 2, 2, 128>}]} {
    %c0 = arith.constant 0 : index
    %c0_0 = arith.constant 0 : index
    %c0_1 = arith.constant 0 : index
    %c0_2 = arith.constant 0 : index
    %0 = vector.load %arg2[%c0, %c0_0, %c0_1, %c0_2] : memref<2x4x2x128xf32, #tpu.memory_space<vmem>>, vector<2x4x2x128xf32>
    %cst = arith.constant dense<0.000000e+00> : vector<2x2x128xf32>
    %1 = vector.multi_reduction <add>, %0, %cst [1] : vector<2x4x2x128xf32> to vector<2x2x128xf32>
    %cst_3 = arith.constant 2.000000e+00 : f32
    %2 = vector.broadcast %cst_3 : f32 to vector<2x2x128xf32>
    %3 = arith.mulf %1, %2 : vector<2x2x128xf32>
    %cst_4 = arith.constant 4.000000e+00 : f32
    %4 = vector.broadcast %cst_4 : f32 to vector<2x2x128xf32>
    %5 = arith.addf %3, %4 : vector<2x2x128xf32>
    %c0_5 = arith.constant 0 : index
    %c0_6 = arith.constant 0 : index
    %c0_7 = arith.constant 0 : index
    %6 = vector.load %arg3[%c0_5, %c0_6, %c0_7] : memref<2x2x128xf32, #tpu.memory_space<vmem>>, vector<2x2x128xf32>
    tpu.vector_store %arg3[%c0_5, %c0_6, %c0_7], %5 {strides = array<i32>} : memref<2x2x128xf32, #tpu.memory_space<vmem>>, vector<2x2x128xf32>,
    return
  }
  func.func @transform_0(%arg0: i32, %arg1: i32) -> (i32, i32, i32, i32) {
    %c0_i32 = arith.constant 0 : i32
    %c0_i32_0 = arith.constant 0 : i32
    %c0_i32_1 = arith.constant 0 : i32
    return %arg0, %c0_i32, %arg1, %c0_i32_0 : i32, i32, i32, i32
  }
  func.func @transform_1(%arg0: i32, %arg1: i32) -> (i32, i32, i32) {
    %c0_i32 = arith.constant 0 : i32
    %c0_i32_0 = arith.constant 0 : i32
    return %arg0, %arg1, %c0_i32 : i32, i32, i32
  }
}

</mosaic_0001>

<llo_original>
// kernel: tpu_custom_call.1
$region0: #{tpu_custom_call.1}
  #allocation0 [shape = 'u32[]', space=smem, size = 0x4, offset = 0x4, fixed_abs, tag = 'smem constant byte address 0x4 - core index']
  #allocation1 [shape = 'u32[72,128]{1,0:T(1,128)}', space=vmem, size = 0x9000, scoped, tag = 'internal scratch']
  %s0 = inlined_call_operand.hbm [shape: f32[2,4,2,128], index: 0, kind: input, shape index: {}]
  %s1 = inlined_call_operand.hbm [shape: f32[2,2,128], index: 1, kind: output, shape index: {}]
  %s2 = sld [smem:[#allocation0]]
  $region18: #{tpu_custom_call.1} parent=0
    _
  %s4 = ssub.s32 1, %s2
  %s5 = scalar_select 0, %s4, %s2
  $region1: #{tpu_custom_call.1} parent=0
    #allocation2 [shape = 'u8[8192]{0}', space=vmem, size = 0x2000, scoped, tag = 'input window, operand 0, single buffered']
    #allocation3 [shape = 's32[1]{0}', space=sflag, size = 0x4, scoped, tag = 'scoped memory for tpu_custom_call.1']
    #allocation4 [shape = 's32[1]{0}', space=sflag, size = 0x4, scoped, tag = 'scoped memory for tpu_custom_call.1']
    #allocation5 [shape = 'u8[2048]{0}', space=vmem, size = 0x800, scoped, tag = 'output window, operand 0, single buffered']
    %6 = vsyncpa [#allocation3], 0
    %7 = vsyncpa [#allocation4], 0
    // Predicated region
    $region2: #{tpu_custom_call.1} parent=1 // pred_check
      _
    $region3: #{tpu_custom_call.1} parent=1 // pred_check_branch
      %9 = sbr.rel (0) target = $region5
    $region4: #{tpu_custom_call.1} parent=1 // pred_region
      %11 = vsyncadd [#allocation3], 0
      %s12 = sshll.u32 %s0, 4
      %s13 = int_to_ptr.hbm [resolvable:$true] %s12
      %s14 = sshll.u32 [#allocation2], 4
      %s15 = int_to_ptr.vmem [resolvable:$true] %s14
      %20 = dma.hbm_to_vmem [thread:$0]  %s13, 256, %s15, [#allocation3], 32, 32, 2
    $region5: #{tpu_custom_call.1} parent=1 // pred_fallthru
      _
    // Predicated region
    $region6: #{tpu_custom_call.1} parent=1 // pred_check
      _
    $region7: #{tpu_custom_call.1} parent=1 // pred_check_branch
      %22 = sbr.rel (0) target = $region9
    $region8: #{tpu_custom_call.1} parent=1 // pred_region
      %24 = dma.done [#allocation3], 256
    $region9: #{tpu_custom_call.1} parent=1 // pred_fallthru
      _
    %v25 = vld [vmem:[#allocation2] sm:$0x3]
    %v26 = vld [vmem:[#allocation2 + $0x2] sm:$0x3]
    %v27 = vld [vmem:[#allocation2 + $0x4] sm:$0x3]
    %v28 = vld [vmem:[#allocation2 + $0x6] sm:$0x3]
    %v29 = vld [vmem:[#allocation2 + $0x8] sm:$0x3]
    %v30 = vld [vmem:[#allocation2 + $0xa] sm:$0x3]
    %v31 = vld [vmem:[#allocation2 + $0xc] sm:$0x3]
    %v32 = vld [vmem:[#allocation2 + $0xe] sm:$0x3]
    %vm33 = vcmask 1041408
    %v34 = vsel %vm33, %v25, 0.0
    %v35 = vsel %vm33, %v26, 0.0
    %v36 = vadd.f32 %v34, %v35
    %v37 = vsel %vm33, %v27, 0.0
    %v38 = vadd.f32 %v36, %v37
    %v39 = vsel %vm33, %v28, 0.0
    %v40 = vadd.f32 %v38, %v39
    %v41 = vsel %vm33, %v29, 0.0
    %v42 = vsel %vm33, %v30, 0.0
    %v43 = vadd.f32 %v41, %v42
    %v44 = vsel %vm33, %v31, 0.0
    %v45 = vadd.f32 %v43, %v44
    %v46 = vsel %vm33, %v32, 0.0
    %v47 = vadd.f32 %v45, %v46
    %v48 = vmul.f32 %v40, 2.0
    %v49 = vmul.f32 %v47, 2.0
    %v50 = vadd.f32 %v48, 4.0
    %v51 = vadd.f32 %v49, 4.0
    %52 = vst [vmem:[#allocation5] sm:$0x3] %v50
    %53 = vst [vmem:[#allocation5 + $0x2] sm:$0x3] %v51
    // Predicated region
    $region10: #{tpu_custom_call.1} parent=1 // pred_check
      _
    $region11: #{tpu_custom_call.1} parent=1 // pred_check_branch
      %55 = sbr.rel (0) target = $region13
    $region12: #{tpu_custom_call.1} parent=1 // pred_region
      %57 = vsyncadd [#allocation4], 0
      %s58 = sshll.u32 [#allocation5], 4
      %s59 = int_to_ptr.vmem [resolvable:$true] %s58
      %s60 = sshll.u32 %s1, 4
      %s61 = int_to_ptr.hbm [resolvable:$true] %s60
      %66 = dma.vmem_to_hbm [thread:$0]  %s59, 64, %s61, [#allocation4], 32, 32, 2
    $region13: #{tpu_custom_call.1} parent=1 // pred_fallthru
      _
    // Predicated region
    $region14: #{tpu_custom_call.1} parent=1 // pred_check
      _
    $region15: #{tpu_custom_call.1} parent=1 // pred_check_branch
      %68 = sbr.rel (0) target = $region17
    $region16: #{tpu_custom_call.1} parent=1 // pred_region
      %70 = dma.done [#allocation4], 64
    $region17: #{tpu_custom_call.1} parent=1 // pred_fallthru
      _
    %71 = vsyncpa [#allocation3], 1
    %72 = vsyncpa [#allocation4], 1

</llo_original>
